<compile_context>
chip_gen: v7x
topology: tpu7x:2x2x1
jax: 0.10.0
libtpu: 0.0.40
codegen_flags: <defaults>
</compile_context>

<pallas_src>
import math

import jax
import jax.numpy as jnp
from jax.experimental import pallas as pl
from jax.experimental.pallas import tpu as pltpu


NEG_SLOPE = 0.2


def _leaky(v):
    return jnp.where(v > 0, v, NEG_SLOPE * v)


def _round_up(x, m):
    return ((x + m - 1) // m) * m


def _make_kernel(n_blocks):
    """Fused MLP kernel: in-proj, n_blocks resnet blocks, lane-dense out-proj."""

    def kernel(x_ref, w_in_ref, b_in_ref, w_blk_ref, b_blk_ref,
               w_out_ref, b_out_ref, o_ref):
        x = x_ref[...]                                             # (Bt, c_dim)

        # conv1d (1x1)  ->  linear
        h = jnp.dot(x, w_in_ref[...],
                    preferred_element_type=jnp.float32) + b_in_ref[...]

        # ResnetBlockConv1dWoBN stack (statically unrolled; static weight idx).
        for blk in range(n_blocks):
            w0 = w_blk_ref[2 * blk]                                # (H, H)
            b0 = b_blk_ref[2 * blk]                                # (1, H)
            w1 = w_blk_ref[2 * blk + 1]
            b1 = b_blk_ref[2 * blk + 1]
            net = jnp.dot(_leaky(h), w0,
                          preferred_element_type=jnp.float32) + b0
            dx = jnp.dot(_leaky(net), w1,
                         preferred_element_type=jnp.float32) + b1
            h = h + dx

        # out_conv1d(act(h)) — lane-dense (padded to >=128 lanes) store.
        out = jnp.dot(_leaky(h), w_out_ref[...],
                      preferred_element_type=jnp.float32) + b_out_ref[...]
        o_ref[...] = out.astype(o_ref.dtype)

    return kernel


def nsd_paramnet_forward(x, params, *, batch_tile=256):
    """x: (B, c_dim) f32.  params: (w_in, b_in, w_blk, b_blk, w_out, b_out)."""
    w_in, b_in, w_blk, b_blk, w_out, b_out = params
    B, c_dim = x.shape
    H = w_in.shape[1]
    assert w_blk.shape[0] % 2 == 0 and w_blk.shape[0] >= 2
    n_blocks = w_blk.shape[0] // 2
    param_out_dim = w_out.shape[1]

    # ---- lane-dense output: pad out-proj to a multiple of 128 lanes ----
    out_pad = _round_up(max(param_out_dim, 128), 128)
    if out_pad != param_out_dim:
        w_out_p = jnp.zeros((H, out_pad), w_out.dtype).at[:, :param_out_dim].set(w_out)
        b_out_p = jnp.zeros((1, out_pad), b_out.dtype).at[:, :param_out_dim].set(b_out)
    else:
        w_out_p, b_out_p = w_out, b_out

    # ---- batch tiling: big MXU-aligned tiles, pad B instead of asserting ----
    bt = min(batch_tile, _round_up(B, 8))
    bt = max(8, _round_up(bt, 8))
    B_pad = _round_up(B, bt)
    if B_pad != B:
        x_p = jnp.zeros((B_pad, c_dim), x.dtype).at[:B].set(x)
    else:
        x_p = x

    kernel = _make_kernel(n_blocks)

    in_specs = [
        pl.BlockSpec((bt, c_dim), lambda i: (i, 0)),               # x tile
        pl.BlockSpec(w_in.shape, lambda i: (0, 0)),                # grid-invariant
        pl.BlockSpec(b_in.shape, lambda i: (0, 0)),
        pl.BlockSpec(w_blk.shape, lambda i: (0, 0, 0)),
        pl.BlockSpec(b_blk.shape, lambda i: (0, 0, 0)),
        pl.BlockSpec(w_out_p.shape, lambda i: (0, 0)),
        pl.BlockSpec(b_out_p.shape, lambda i: (0, 0)),
    ]
    out_spec = pl.BlockSpec((bt, out_pad), lambda i: (i, 0))

    out = pl.pallas_call(
        kernel,
        out_shape=jax.ShapeDtypeStruct((B_pad, out_pad), jnp.float32),
        grid_spec=pltpu.PrefetchScalarGridSpec(
            num_scalar_prefetch=0,
            grid=(B_pad // bt,),
            in_specs=in_specs,
            out_specs=out_spec,
        ),
        compiler_params=pltpu.CompilerParams(
            dimension_semantics=("parallel",)),
    )(x_p, w_in, b_in, w_blk, b_blk, w_out_p, b_out_p)

    return out[:B, :param_out_dim]


def init_params(key, c_dim, hidden_size, param_out_dim, n_blocks,
                init_out_conv_with_zeros=False):
    """PyTorch-Conv1d-style uniform(+-1/sqrt(fan_in)) init.

    Weights stored transposed as (in, out); biases as (1, out).  Block
    weights/biases stacked: w_blk (2*n_blocks, H, H), b_blk (2*n_blocks, 1, H).
    """
    def linear(k, fan_in, fan_out, zeros=False):
        if zeros:
            return (jnp.zeros((fan_in, fan_out), jnp.float32),
                    jnp.zeros((1, fan_out), jnp.float32))
        kw, kb = jax.random.split(k)
        bound = 1.0 / math.sqrt(fan_in)
        w = jax.random.uniform(kw, (fan_in, fan_out), jnp.float32, -bound, bound)
        b = jax.random.uniform(kb, (1, fan_out), jnp.float32, -bound, bound)
        return w, b

    keys = jax.random.split(key, 2 + 2 * n_blocks)
    k_idx = 0

    w_in, b_in = linear(keys[k_idx], c_dim, hidden_size); k_idx += 1

    blk_ws, blk_bs = [], []
    for _ in range(n_blocks):
        w0, b0 = linear(keys[k_idx], hidden_size, hidden_size); k_idx += 1
        w1, b1 = linear(keys[k_idx], hidden_size, hidden_size); k_idx += 1
        blk_ws += [w0, w1]
        blk_bs += [b0, b1]
    w_blk = jnp.stack(blk_ws, axis=0)                     # (2*n_blocks, H, H)
    b_blk = jnp.stack(blk_bs, axis=0)                     # (2*n_blocks, 1, H)

    w_out, b_out = linear(keys[k_idx], hidden_size, param_out_dim,
                          zeros=init_out_conv_with_zeros)
    return (w_in, b_in, w_blk, b_blk, w_out, b_out)


def reference_forward(x, params):
    """Pure-JAX reference of the same MLP for correctness checking."""
    w_in, b_in, w_blk, b_blk, w_out, b_out = params
    n_blocks = w_blk.shape[0] // 2
    h = x @ w_in + b_in
    for blk in range(n_blocks):
        net = _leaky(h) @ w_blk[2 * blk] + b_blk[2 * blk]
        dx = _leaky(net) @ w_blk[2 * blk + 1] + b_blk[2 * blk + 1]
        h = h + dx
    return _leaky(h) @ w_out + b_out


if __name__ == "__main__":
    # Small config consistent with the module:
    #   c_dim=32, hidden_size=64, param_out_dim=16, depth=4 -> 2 resnet blocks.
    B = 16
    c_dim = 32
    hidden_size = 64
    param_out_dim = 16
    depth = 4
    n_blocks = depth - 2

    key = jax.random.PRNGKey(0)
    k_x, k_p, k_x2 = jax.random.split(key, 3)

    x = jax.random.normal(k_x, (B, c_dim), jnp.float32)
    params = init_params(k_p, c_dim, hidden_size, param_out_dim, n_blocks)

    out = nsd_paramnet_forward(x, params)           # default batch_tile=256
    out = jax.block_until_ready(out)
    ref = reference_forward(x, params)
    assert out.shape == (B, param_out_dim)
    assert jnp.allclose(out, ref, atol=1e-5, rtol=1e-5)

    # Second check: B not divisible by the tile (exercises padding + 2-step grid).
    B2 = 200
    x2 = jax.random.normal(k_x2, (B2, c_dim), jnp.float32)
    out2 = jax.block_until_ready(nsd_paramnet_forward(x2, params, batch_tile=128))
    ref2 = reference_forward(x2, params)
    assert out2.shape == (B2, param_out_dim)
    assert jnp.allclose(out2, ref2, atol=1e-5, rtol=1e-5)

    print("KERNEL_OK")
</pallas_src>

<mosaic_0001>
module attributes {stable_mosaic.version = 11 : i64} {
  func.func @kernel(%arg0: i32, %arg1: memref<16x32xf32, #tpu.memory_space<vmem>>, %arg2: memref<32x64xf32, #tpu.memory_space<vmem>>, %arg3: memref<1x64xf32, #tpu.memory_space<vmem>>, %arg4: memref<4x64x64xf32, #tpu.memory_space<vmem>>, %arg5: memref<4x1x64xf32, #tpu.memory_space<vmem>>, %arg6: memref<64x128xf32, #tpu.memory_space<vmem>>, %arg7: memref<1x128xf32, #tpu.memory_space<vmem>>, %arg8: memref<16x128xf32, #tpu.memory_space<vmem>>) attributes {dimension_semantics = [#tpu.dimension_semantics<parallel>], iteration_bounds = array<i64: 1>, scalar_prefetch = 0 : i64, scratch_operands = 0 : i64, tpu.core_type = #tpu.core_type<tc>, window_params = [{transform_indices = @transform_0, window_bounds = array<i64: 16, 32>}, {pipeline_mode = #tpu.pipeline_mode<synchronous>, transform_indices = @transform_1, window_bounds = array<i64: 32, 64>}, {pipeline_mode = #tpu.pipeline_mode<synchronous>, transform_indices = @transform_2, window_bounds = array<i64: 1, 64>}, {pipeline_mode = #tpu.pipeline_mode<synchronous>, transform_indices = @transform_3, window_bounds = array<i64: 4, 64, 64>}, {pipeline_mode = #tpu.pipeline_mode<synchronous>, transform_indices = @transform_4, window_bounds = array<i64: 4, 1, 64>}, {pipeline_mode = #tpu.pipeline_mode<synchronous>, transform_indices = @transform_5, window_bounds = array<i64: 64, 128>}, {pipeline_mode = #tpu.pipeline_mode<synchronous>, transform_indices = @transform_6, window_bounds = array<i64: 1, 128>}, {transform_indices = @transform_7, window_bounds = array<i64: 16, 128>}]} {
    %c0 = arith.constant 0 : index
    %c0_0 = arith.constant 0 : index
    %0 = vector.load %arg1[%c0, %c0_0] : memref<16x32xf32, #tpu.memory_space<vmem>>, vector<16x32xf32>
    %c0_1 = arith.constant 0 : index
    %c0_2 = arith.constant 0 : index
    %1 = vector.load %arg2[%c0_1, %c0_2] : memref<32x64xf32, #tpu.memory_space<vmem>>, vector<32x64xf32>
    %cst = arith.constant dense<0.000000e+00> : vector<16x64xf32>
    %2 = tpu.matmul %0, %1, %cst {dimension_numbers = #tpu.dot_dimension_numbers<[1], [0], [0], [1], [0, 0, 1, 1], [], []>} : vector<16x32xf32>, vector<32x64xf32>, vector<16x64xf32> -> vector<16x64xf32>
    %c0_3 = arith.constant 0 : index
    %c0_4 = arith.constant 0 : index
    %3 = vector.load %arg3[%c0_3, %c0_4] : memref<1x64xf32, #tpu.memory_space<vmem>>, vector<1x64xf32>
    %4 = vector.broadcast %3 : vector<1x64xf32> to vector<16x64xf32>
    %5 = arith.addf %2, %4 : vector<16x64xf32>
    %c0_5 = arith.constant 0 : index
    %c0_6 = arith.constant 0 : index
    %c0_7 = arith.constant 0 : index
    %6 = vector.load %arg4[%c0_5, %c0_6, %c0_7] : memref<4x64x64xf32, #tpu.memory_space<vmem>>, vector<1x64x64xf32>
    %7 = vector.shape_cast %6 : vector<1x64x64xf32> to vector<64x64xf32>
    %c0_8 = arith.constant 0 : index
    %c0_9 = arith.constant 0 : index
    %c0_10 = arith.constant 0 : index
    %8 = vector.load %arg5[%c0_8, %c0_9, %c0_10] : memref<4x1x64xf32, #tpu.memory_space<vmem>>, vector<1x1x64xf32>
    %9 = vector.shape_cast %8 : vector<1x1x64xf32> to vector<1x64xf32>
    %c1 = arith.constant 1 : index
    %c0_11 = arith.constant 0 : index
    %c0_12 = arith.constant 0 : index
    %10 = vector.load %arg4[%c1, %c0_11, %c0_12] : memref<4x64x64xf32, #tpu.memory_space<vmem>>, vector<1x64x64xf32>
    %11 = vector.shape_cast %10 : vector<1x64x64xf32> to vector<64x64xf32>
    %c1_13 = arith.constant 1 : index
    %c0_14 = arith.constant 0 : index
    %c0_15 = arith.constant 0 : index
    %12 = vector.load %arg5[%c1_13, %c0_14, %c0_15] : memref<4x1x64xf32, #tpu.memory_space<vmem>>, vector<1x1x64xf32>
    %13 = vector.shape_cast %12 : vector<1x1x64xf32> to vector<1x64xf32>
    %cst_16 = arith.constant 0.000000e+00 : f32
    %14 = vector.broadcast %cst_16 : f32 to vector<16x64xf32>
    %15 = arith.cmpf ogt, %5, %14 : vector<16x64xf32>
    %cst_17 = arith.constant 2.000000e-01 : f32
    %16 = vector.broadcast %cst_17 : f32 to vector<16x64xf32>
    %17 = arith.mulf %16, %5 : vector<16x64xf32>
    %18 = arith.select %15, %5, %17 : vector<16x64xi1>, vector<16x64xf32>
    %cst_18 = arith.constant dense<0.000000e+00> : vector<16x64xf32>
    %19 = tpu.matmul %18, %7, %cst_18 {dimension_numbers = #tpu.dot_dimension_numbers<[1], [0], [0], [1], [0, 0, 1, 1], [], []>} : vector<16x64xf32>, vector<64x64xf32>, vector<16x64xf32> -> vector<16x64xf32>
    %20 = vector.broadcast %9 : vector<1x64xf32> to vector<16x64xf32>
    %21 = arith.addf %19, %20 : vector<16x64xf32>
    %cst_19 = arith.constant 0.000000e+00 : f32
    %22 = vector.broadcast %cst_19 : f32 to vector<16x64xf32>
    %23 = arith.cmpf ogt, %21, %22 : vector<16x64xf32>
    %cst_20 = arith.constant 2.000000e-01 : f32
    %24 = vector.broadcast %cst_20 : f32 to vector<16x64xf32>
    %25 = arith.mulf %24, %21 : vector<16x64xf32>
    %26 = arith.select %23, %21, %25 : vector<16x64xi1>, vector<16x64xf32>
    %cst_21 = arith.constant dense<0.000000e+00> : vector<16x64xf32>
    %27 = tpu.matmul %26, %11, %cst_21 {dimension_numbers = #tpu.dot_dimension_numbers<[1], [0], [0], [1], [0, 0, 1, 1], [], []>} : vector<16x64xf32>, vector<64x64xf32>, vector<16x64xf32> -> vector<16x64xf32>
    %28 = vector.broadcast %13 : vector<1x64xf32> to vector<16x64xf32>
    %29 = arith.addf %27, %28 : vector<16x64xf32>
    %30 = arith.addf %5, %29 : vector<16x64xf32>
    %c2 = arith.constant 2 : index
    %c0_22 = arith.constant 0 : index
    %c0_23 = arith.constant 0 : index
    %31 = vector.load %arg4[%c2, %c0_22, %c0_23] : memref<4x64x64xf32, #tpu.memory_space<vmem>>, vector<1x64x64xf32>
    %32 = vector.shape_cast %31 : vector<1x64x64xf32> to vector<64x64xf32>
    %c2_24 = arith.constant 2 : index
    %c0_25 = arith.constant 0 : index
    %c0_26 = arith.constant 0 : index
    %33 = vector.load %arg5[%c2_24, %c0_25, %c0_26] : memref<4x1x64xf32, #tpu.memory_space<vmem>>, vector<1x1x64xf32>
    %34 = vector.shape_cast %33 : vector<1x1x64xf32> to vector<1x64xf32>
    %c3 = arith.constant 3 : index
    %c0_27 = arith.constant 0 : index
    %c0_28 = arith.constant 0 : index
    %35 = vector.load %arg4[%c3, %c0_27, %c0_28] : memref<4x64x64xf32, #tpu.memory_space<vmem>>, vector<1x64x64xf32>
    %36 = vector.shape_cast %35 : vector<1x64x64xf32> to vector<64x64xf32>
    %c3_29 = arith.constant 3 : index
    %c0_30 = arith.constant 0 : index
    %c0_31 = arith.constant 0 : index
    %37 = vector.load %arg5[%c3_29, %c0_30, %c0_31] : memref<4x1x64xf32, #tpu.memory_space<vmem>>, vector<1x1x64xf32>
    %38 = vector.shape_cast %37 : vector<1x1x64xf32> to vector<1x64xf32>
    %cst_32 = arith.constant 0.000000e+00 : f32
    %39 = vector.broadcast %cst_32 : f32 to vector<16x64xf32>
    %40 = arith.cmpf ogt, %30, %39 : vector<16x64xf32>
    %cst_33 = arith.constant 2.000000e-01 : f32
    %41 = vector.broadcast %cst_33 : f32 to vector<16x64xf32>
    %42 = arith.mulf %41, %30 : vector<16x64xf32>
    %43 = arith.select %40, %30, %42 : vector<16x64xi1>, vector<16x64xf32>
    %cst_34 = arith.constant dense<0.000000e+00> : vector<16x64xf32>
    %44 = tpu.matmul %43, %32, %cst_34 {dimension_numbers = #tpu.dot_dimension_numbers<[1], [0], [0], [1], [0, 0, 1, 1], [], []>} : vector<16x64xf32>, vector<64x64xf32>, vector<16x64xf32> -> vector<16x64xf32>
    %45 = vector.broadcast %34 : vector<1x64xf32> to vector<16x64xf32>
    %46 = arith.addf %44, %45 : vector<16x64xf32>
    %cst_35 = arith.constant 0.000000e+00 : f32
    %47 = vector.broadcast %cst_35 : f32 to vector<16x64xf32>
    %48 = arith.cmpf ogt, %46, %47 : vector<16x64xf32>
    %cst_36 = arith.constant 2.000000e-01 : f32
    %49 = vector.broadcast %cst_36 : f32 to vector<16x64xf32>
    %50 = arith.mulf %49, %46 : vector<16x64xf32>
    %51 = arith.select %48, %46, %50 : vector<16x64xi1>, vector<16x64xf32>
    %cst_37 = arith.constant dense<0.000000e+00> : vector<16x64xf32>
    %52 = tpu.matmul %51, %36, %cst_37 {dimension_numbers = #tpu.dot_dimension_numbers<[1], [0], [0], [1], [0, 0, 1, 1], [], []>} : vector<16x64xf32>, vector<64x64xf32>, vector<16x64xf32> -> vector<16x64xf32>
    %53 = vector.broadcast %38 : vector<1x64xf32> to vector<16x64xf32>
    %54 = arith.addf %52, %53 : vector<16x64xf32>
    %55 = arith.addf %30, %54 : vector<16x64xf32>
    %cst_38 = arith.constant 0.000000e+00 : f32
    %56 = vector.broadcast %cst_38 : f32 to vector<16x64xf32>
    %57 = arith.cmpf ogt, %55, %56 : vector<16x64xf32>
    %cst_39 = arith.constant 2.000000e-01 : f32
    %58 = vector.broadcast %cst_39 : f32 to vector<16x64xf32>
    %59 = arith.mulf %58, %55 : vector<16x64xf32>
    %60 = arith.select %57, %55, %59 : vector<16x64xi1>, vector<16x64xf32>
    %c0_40 = arith.constant 0 : index
    %c0_41 = arith.constant 0 : index
    %61 = vector.load %arg6[%c0_40, %c0_41] : memref<64x128xf32, #tpu.memory_space<vmem>>, vector<64x128xf32>
    %cst_42 = arith.constant dense<0.000000e+00> : vector<16x128xf32>
    %62 = tpu.matmul %60, %61, %cst_42 {dimension_numbers = #tpu.dot_dimension_numbers<[1], [0], [0], [1], [0, 0, 1, 1], [], []>} : vector<16x64xf32>, vector<64x128xf32>, vector<16x128xf32> -> vector<16x128xf32>
    %c0_43 = arith.constant 0 : index
    %c0_44 = arith.constant 0 : index
    %63 = vector.load %arg7[%c0_43, %c0_44] : memref<1x128xf32, #tpu.memory_space<vmem>>, vector<1x128xf32>
    %64 = vector.broadcast %63 : vector<1x128xf32> to vector<16x128xf32>
    %65 = arith.addf %62, %64 : vector<16x128xf32>
    %c0_45 = arith.constant 0 : index
    %c0_46 = arith.constant 0 : index
    %66 = vector.load %arg8[%c0_45, %c0_46] : memref<16x128xf32, #tpu.memory_space<vmem>>, vector<16x128xf32>
    tpu.vector_store %arg8[%c0_45, %c0_46], %65 {strides = array<i32>} : memref<16x128xf32, #tpu.memory_space<vmem>>, vector<16x128xf32>,
    return
  }
  func.func @transform_0(%arg0: i32) -> (i32, i32) {
    %c0_i32 = arith.constant 0 : i32
    %c0_i32_0 = arith.constant 0 : i32
    return %arg0, %c0_i32 : i32, i32
  }
  func.func @transform_1(%arg0: i32) -> (i32, i32) {
    %c0_i32 = arith.constant 0 : i32
    %c0_i32_0 = arith.constant 0 : i32
    %c0_i32_1 = arith.constant 0 : i32
    return %c0_i32, %c0_i32_0 : i32, i32
  }
  func.func @transform_2(%arg0: i32) -> (i32, i32) {
    %c0_i32 = arith.constant 0 : i32
    %c0_i32_0 = arith.constant 0 : i32
    %c0_i32_1 = arith.constant 0 : i32
    return %c0_i32, %c0_i32_0 : i32, i32
  }
  func.func @transform_3(%arg0: i32) -> (i32, i32, i32) {
    %c0_i32 = arith.constant 0 : i32
    %c0_i32_0 = arith.constant 0 : i32
    %c0_i32_1 = arith.constant 0 : i32
    %c0_i32_2 = arith.constant 0 : i32
    return %c0_i32, %c0_i32_0, %c0_i32_1 : i32, i32, i32
  }
  func.func @transform_4(%arg0: i32) -> (i32, i32, i32) {
    %c0_i32 = arith.constant 0 : i32
    %c0_i32_0 = arith.constant 0 : i32
    %c0_i32_1 = arith.constant 0 : i32
    %c0_i32_2 = arith.constant 0 : i32
    return %c0_i32, %c0_i32_0, %c0_i32_1 : i32, i32, i32
  }
  func.func @transform_5(%arg0: i32) -> (i32, i32) {
    %c0_i32 = arith.constant 0 : i32
    %c0_i32_0 = arith.constant 0 : i32
    %c0_i32_1 = arith.constant 0 : i32
    return %c0_i32, %c0_i32_0 : i32, i32
  }
  func.func @transform_6(%arg0: i32) -> (i32, i32) {
    %c0_i32 = arith.constant 0 : i32
    %c0_i32_0 = arith.constant 0 : i32
    %c0_i32_1 = arith.constant 0 : i32
    return %c0_i32, %c0_i32_0 : i32, i32
  }
  func.func @transform_7(%arg0: i32) -> (i32, i32) {
    %c0_i32 = arith.constant 0 : i32
    %c0_i32_0 = arith.constant 0 : i32
    return %arg0, %c0_i32 : i32, i32
  }
}

</mosaic_0001>

<llo_original>
// kernel: tpu_custom_call.1
$region0: #{tpu_custom_call.1}
  #allocation0 [shape = 'u32[]', space=smem, size = 0x4, offset = 0x4, fixed_abs, tag = 'smem constant byte address 0x4 - core index']
  #allocation1 [shape = 'u32[144,128]{1,0:T(1,128)}', space=vmem, size = 0x12000, scoped, tag = 'internal scratch']
  %s0 = inlined_call_operand.hbm [shape: f32[16,32], index: 0, kind: input, shape index: {}]
  %s1 = inlined_call_operand.hbm [shape: f32[32,64], index: 1, kind: input, shape index: {}]
  %s2 = inlined_call_operand.vmem [shape: f32[1,64], index: 2, kind: input, shape index: {}]
  %s3 = inlined_call_operand.hbm [shape: f32[4,64,64], index: 3, kind: input, shape index: {}]
  %s4 = inlined_call_operand.vmem [shape: f32[4,1,64], index: 4, kind: input, shape index: {}]
  %s5 = inlined_call_operand.hbm [shape: f32[64,128], index: 5, kind: input, shape index: {}]
  %s6 = inlined_call_operand.vmem [shape: f32[1,128], index: 6, kind: input, shape index: {}]
  %s7 = inlined_call_operand.hbm [shape: f32[16,128], index: 7, kind: output, shape index: {}]
  %s8 = sld [smem:[#allocation0]]
  $region54: #{tpu_custom_call.1} parent=0
    _
  %s10 = ssub.s32 1, %s8
  %s11 = scalar_select 0, %s10, %s8
  $region1: #{tpu_custom_call.1} parent=0
    #allocation2 [shape = 'u8[8192]{0}', space=vmem, size = 0x2000, scoped, tag = 'input window, operand 0, single buffered']
    #allocation3 [shape = 's32[1]{0}', space=sflag, size = 0x4, scoped, tag = 'scoped memory for tpu_custom_call.1']
    #allocation4 [shape = 's32[1]{0}', space=sflag, size = 0x4, scoped, tag = 'scoped memory for tpu_custom_call.1']
    #allocation5 [shape = 'u8[16384]{0}', space=vmem, size = 0x4000, scoped, tag = 'input window, operand 1, single buffered']
    #allocation6 [shape = 's32[1]{0}', space=sflag, size = 0x4, scoped, tag = 'scoped memory for tpu_custom_call.1']
    #allocation7 [shape = 'u8[131072]{0}', space=vmem, size = 0x20000, scoped, tag = 'input window, operand 3, single buffered']
    #allocation8 [shape = 'u8[32768]{0}', space=vmem, size = 0x8000, scoped, tag = 'input window, operand 5, single buffered']
    #allocation9 [shape = 's32[1]{0}', space=sflag, size = 0x4, scoped, tag = 'scoped memory for tpu_custom_call.1']
    #allocation10 [shape = 'u8[8192]{0}', space=vmem, size = 0x2000, scoped, tag = 'output window, operand 0, single buffered']
    %12 = vsyncpa [#allocation3], 0
    %13 = vsyncpa [#allocation6], 0
    %14 = vsyncpa [#allocation9], 0
    %15 = vsyncpa [#allocation4], 0
    // Predicated region
    $region2: #{tpu_custom_call.1} parent=1 // pred_check
      _
    $region3: #{tpu_custom_call.1} parent=1 // pred_check_branch
      %17 = sbr.rel (0) target = $region5
    $region4: #{tpu_custom_call.1} parent=1 // pred_region
      %s19 = ssub.s32 256, 256
      %20 = vsyncadd [#allocation3], %s19
      %s21 = sshll.u32 [#allocation2], 4
      %s22 = int_to_ptr.vmem [resolvable:$true] %s21
      %27 = dma.hbm_to_vmem [thread:$0]  %s0, 256, %s22, [#allocation3], 128, 128, 8
    $region5: #{tpu_custom_call.1} parent=1 // pred_fallthru
      _
    // Predicated region
    $region6: #{tpu_custom_call.1} parent=1 // pred_check
      _
    $region7: #{tpu_custom_call.1} parent=1 // pred_check_branch
      %29 = sbr.rel (0) target = $region9
    $region8: #{tpu_custom_call.1} parent=1 // pred_region
      %s31 = ssub.s32 512, 512
      %32 = vsyncadd [#allocation6], %s31
      %s33 = sshll.u32 [#allocation5], 4
      %s34 = int_to_ptr.vmem [resolvable:$true] %s33
      %39 = dma.hbm_to_vmem [thread:$0]  %s1, 512, %s34, [#allocation6], 128, 128, 8
    $region9: #{tpu_custom_call.1} parent=1 // pred_fallthru
      _
    // Predicated region
    $region10: #{tpu_custom_call.1} parent=1 // pred_check
      _
    $region11: #{tpu_custom_call.1} parent=1 // pred_check_branch
      %41 = sbr.rel (0) target = $region13
    $region12: #{tpu_custom_call.1} parent=1 // pred_region
      _
    $region13: #{tpu_custom_call.1} parent=1 // pred_fallthru
      _
    // Predicated region
    $region14: #{tpu_custom_call.1} parent=1 // pred_check
      _
    $region15: #{tpu_custom_call.1} parent=1 // pred_check_branch
      %43 = sbr.rel (0) target = $region17
    $region16: #{tpu_custom_call.1} parent=1 // pred_region
      %s45 = ssub.s32 4096, 4096
      %46 = vsyncadd [#allocation6], %s45
      %s47 = sshll.u32 [#allocation7], 4
      %s48 = int_to_ptr.vmem [resolvable:$true] %s47
      %53 = dma.hbm_to_vmem [thread:$0]  %s3, 4096, %s48, [#allocation6], 128, 128, 8
    $region17: #{tpu_custom_call.1} parent=1 // pred_fallthru
      _
    // Predicated region
    $region18: #{tpu_custom_call.1} parent=1 // pred_check
      _
    $region19: #{tpu_custom_call.1} parent=1 // pred_check_branch
      %55 = sbr.rel (0) target = $region21
    $region20: #{tpu_custom_call.1} parent=1 // pred_region
      _
    $region21: #{tpu_custom_call.1} parent=1 // pred_fallthru
      _
    // Predicated region
    $region22: #{tpu_custom_call.1} parent=1 // pred_check
      _
    $region23: #{tpu_custom_call.1} parent=1 // pred_check_branch
      %57 = sbr.rel (0) target = $region25
    $region24: #{tpu_custom_call.1} parent=1 // pred_region
      %s59 = ssub.s32 1024, 1024
      %60 = vsyncadd [#allocation9], %s59
      %s61 = sshll.u32 [#allocation8], 4
      %s62 = int_to_ptr.vmem [resolvable:$true] %s61
      %67 = dma.hbm_to_vmem [thread:$0]  %s5, 1024, %s62, [#allocation9], 128, 128, 8
    $region25: #{tpu_custom_call.1} parent=1 // pred_fallthru
      _
    // Predicated region
    $region26: #{tpu_custom_call.1} parent=1 // pred_check
      _
    $region27: #{tpu_custom_call.1} parent=1 // pred_check_branch
      %69 = sbr.rel (0) target = $region29
    $region28: #{tpu_custom_call.1} parent=1 // pred_region
      _
    $region29: #{tpu_custom_call.1} parent=1 // pred_fallthru
      _
    // Predicated region
    $region30: #{tpu_custom_call.1} parent=1 // pred_check
      _
    $region31: #{tpu_custom_call.1} parent=1 // pred_check_branch
      %71 = sbr.rel (0) target = $region33
    $region32: #{tpu_custom_call.1} parent=1 // pred_region
      %72 = dma.done [#allocation3], 256
    $region33: #{tpu_custom_call.1} parent=1 // pred_fallthru
      _
    // Predicated region
    $region34: #{tpu_custom_call.1} parent=1 // pred_check
      _
    $region35: #{tpu_custom_call.1} parent=1 // pred_check_branch
      %74 = sbr.rel (0) target = $region37
    $region36: #{tpu_custom_call.1} parent=1 // pred_region
      %75 = dma.done [#allocation6], 512
    $region37: #{tpu_custom_call.1} parent=1 // pred_fallthru
      _
    // Predicated region
    $region38: #{tpu_custom_call.1} parent=1 // pred_check
      _
    $region39: #{tpu_custom_call.1} parent=1 // pred_check_branch
      %77 = sbr.rel (0) target = $region41
    $region40: #{tpu_custom_call.1} parent=1 // pred_region
      %78 = dma.done [#allocation6], 4096
    $region41: #{tpu_custom_call.1} parent=1 // pred_fallthru
      _
    // Predicated region
    $region42: #{tpu_custom_call.1} parent=1 // pred_check
      _
    $region43: #{tpu_custom_call.1} parent=1 // pred_check_branch
      %80 = sbr.rel (0) target = $region45
    $region44: #{tpu_custom_call.1} parent=1 // pred_region
      %81 = dma.done [#allocation9], 1024
    $region45: #{tpu_custom_call.1} parent=1 // pred_fallthru
      _
    %v82 = vld [vmem:[#allocation2] sm:$0xff]
    %v83 = vld [vmem:[#allocation2 + $0x8] sm:$0xff]
    %v84 = vld [vmem:[#allocation5] sm:$0xff]
    %v85 = vld [vmem:[#allocation5 + $0x8] sm:$0xff]
    %v86 = vld [vmem:[#allocation5 + $0x10] sm:$0xff]
    %v87 = vld [vmem:[#allocation5 + $0x18] sm:$0xff]
    %v88 = vld [vmem:[%s2] sm:$0x1]
    %v90 = vlaneseq
    %v91 = vshrl.u32 %v90, 7
    %v92 = vsub.s32 0, %v91
    %v93 = vrot.slane %v88, %v92
    %vm95 = vcmask 261120
    %v97 = vsel %vm95, %v82, 0
    %v100 = vsel %vm95, %v83, 0
    %102 = vmatprep.subr.mxu0 0.0
    %103 = vmatpush1.msra.mxu0 %v84
    %104 = vmatprep.subr.mxu0 0.0
    %105 = vmatpush1.msra.mxu0 %v85
    %106 = vmatprep.subr.mxu0 0.0
    %107 = vmatpush1.msra.mxu0 %v86
    %108 = vmatprep.subr.mxu0 0.0
    %109 = vmatpush1.msra.mxu0 %v87
    %110 = vmatprep.subr.mxu0 0.0
    %111 = vmatpush1.msra.mxu0 0.0
    %112 = vmatprep.subr.mxu0 0.0
    %113 = vmatpush1.msra.mxu0 0.0
    %114 = vmatprep.subr.mxu0 0.0
    %115 = vmatpush1.msra.mxu0 0.0
    %116 = vmatprep.subr.mxu0 0.0
    %117 = vmatpush1.msra.mxu0 0.0
    %118 = vmatprep.subr.mxu0 0.0
    %119 = vmatpush1.msra.mxu0 0.0
    %120 = vmatprep.subr.mxu0 0.0
    %121 = vmatpush1.msra.mxu0 0.0
    %122 = vmatprep.subr.mxu0 0.0
    %123 = vmatpush1.msra.mxu0 0.0
    %124 = vmatprep.subr.mxu0 0.0
    %125 = vmatpush1.msra.mxu0 0.0
    %126 = vmatprep.subr.mxu0 0.0
    %127 = vmatpush1.msra.mxu0 0.0
    %128 = vmatprep.subr.mxu0 0.0
    %129 = vmatpush1.msra.mxu0 0.0
    %130 = vmatprep.subr.mxu0 0.0
    %131 = vmatpush1.msra.mxu0 0.0
    %132 = vmatprep.subr.mxu0 0.0
    %133 = vmatpush1.msra.mxu0 0.0
    %134 = vmatprep.subr.mxu0 0.0
    %135 = vmatpush1.msra.mxu0 0.0
    %136 = vmatprep.subr.mxu0 0.0
    %137 = vmatpush1.msra.mxu0 0.0
    %138 = vmatprep.subr.mxu0 0.0
    %139 = vmatpush1.msra.mxu0 0.0
    %140 = vmatprep.subr.mxu0 0.0
    %141 = vmatpush1.msra.mxu0 0.0
    %142 = vmatprep.subr.mxu0 0.0
    %143 = vmatpush1.msra.mxu0 0.0
    %144 = vmatprep.subr.mxu0 0.0
    %145 = vmatpush1.msra.mxu0 0.0
    %146 = vmatprep.subr.mxu0 0.0
    %147 = vmatpush1.msra.mxu0 0.0
    %148 = vmatprep.subr.mxu0 0.0
    %149 = vmatpush1.msra.mxu0 0.0
    %150 = vmatprep.subr.mxu0 0.0
    %151 = vmatpush1.msra.mxu0 0.0
    %152 = vmatprep.subr.mxu0 0.0
    %153 = vmatpush1.msra.mxu0 0.0
    %154 = vmatprep.subr.mxu0 0.0
    %155 = vmatpush1.msra.mxu0 0.0
    %156 = vmatprep.subr.mxu0 0.0
    %157 = vmatpush1.msra.mxu0 0.0
    %158 = vmatprep.subr.mxu0 0.0
    %159 = vmatpush1.msra.mxu0 0.0
    %160 = vmatprep.subr.mxu0 0.0
    %161 = vmatpush1.msra.mxu0 0.0
    %162 = vmatprep.subr.mxu0 0.0
    %163 = vmatpush1.msra.mxu0 0.0
    %164 = vmatprep.subr.mxu0 0.0
    %165 = vmatpush1.msra.mxu0 0.0
    %166 = vmatprep.mubr.f32.mxu0 0.0
    %167 = vmatmul.mubr.f32.gmra.mrb[0].mxu0 %v97
    %v168 = vpop.f32.mrb[0].mxu0
    %v169 = vadd.f32 %v93, %v168
    %v170 = vpop.f32.mrb[0].mxu0
    %171 = vmatprep.mubr.f32.mxu0 0.0
    %172 = vmatmul.mubr.f32.gmra.mrb[0].mxu0 %v100
    %v173 = vpop.f32.mrb[0].mxu0
    %v174 = vadd.f32 %v93, %v173
    %v175 = vpop.f32.mrb[0].mxu0
    %176 = vdwg.mxu0
    %v177 = vld [vmem:[#allocation7] sm:$0xff]
    %v178 = vld [vmem:[#allocation7 + $0x8] sm:$0xff]
    %v179 = vld [vmem:[#allocation7 + $0x10] sm:$0xff]
    %v180 = vld [vmem:[#allocation7 + $0x18] sm:$0xff]
    %v181 = vld [vmem:[#allocation7 + $0x20] sm:$0xff]
    %v182 = vld [vmem:[#allocation7 + $0x28] sm:$0xff]
    %v183 = vld [vmem:[#allocation7 + $0x30] sm:$0xff]
    %v184 = vld [vmem:[#allocation7 + $0x38] sm:$0xff]
    %v185 = vld [vmem:[%s4] sm:$0x1]
    %s186 = scalar_lea.vmem [#allocation7], 64
    %v187 = vld [vmem:[%s186] sm:$0xff]
    %v188 = vld [vmem:[%s186 + $0x8] sm:$0xff]
    %v189 = vld [vmem:[%s186 + $0x10] sm:$0xff]
    %v190 = vld [vmem:[%s186 + $0x18] sm:$0xff]
    %v191 = vld [vmem:[%s186 + $0x20] sm:$0xff]
    %v192 = vld [vmem:[%s186 + $0x28] sm:$0xff]
    %v193 = vld [vmem:[%s186 + $0x30] sm:$0xff]
    %v194 = vld [vmem:[%s186 + $0x38] sm:$0xff]
    %s195 = scalar_lea.vmem %s4, 1
    %v196 = vld [vmem:[%s195] sm:$0x1]
    %vm197 = vcmp.gt.f32.partialorder %v169, 0.0
    %vm198 = vcmp.gt.f32.partialorder %v174, 0.0
    %v199 = vmul.f32 %v169, 0.2
    %v200 = vmul.f32 %v174, 0.2
    %v201 = vsel %vm197, %v169, %v199
    %v202 = vsel %vm198, %v174, %v200
    %v204 = vlaneseq
    %v205 = vshrl.u32 %v204, 7
    %v206 = vsub.s32 0, %v205
    %v207 = vrot.slane %v185, %v206
    %vm209 = vcmask 523264
    %v211 = vsel %vm209, %v201, 0
    %v214 = vsel %vm209, %v202, 0
    %216 = vmatprep.subr.mxu0 0.0
    %217 = vmatpush1.msra.mxu0 %v177
    %218 = vmatprep.subr.mxu0 0.0
    %219 = vmatpush1.msra.mxu0 %v178
    %220 = vmatprep.subr.mxu0 0.0
    %221 = vmatpush1.msra.mxu0 %v179
    %222 = vmatprep.subr.mxu0 0.0
    %223 = vmatpush1.msra.mxu0 %v180
    %224 = vmatprep.subr.mxu0 0.0
    %225 = vmatpush1.msra.mxu0 %v181
    %226 = vmatprep.subr.mxu0 0.0
    %227 = vmatpush1.msra.mxu0 %v182
    %228 = vmatprep.subr.mxu0 0.0
    %229 = vmatpush1.msra.mxu0 %v183
    %230 = vmatprep.subr.mxu0 0.0
    %231 = vmatpush1.msra.mxu0 %v184
    %232 = vmatprep.subr.mxu0 0.0
    %233 = vmatpush1.msra.mxu0 0.0
    %234 = vmatprep.subr.mxu0 0.0
    %235 = vmatpush1.msra.mxu0 0.0
    %236 = vmatprep.subr.mxu0 0.0
    %237 = vmatpush1.msra.mxu0 0.0
    %238 = vmatprep.subr.mxu0 0.0
    %239 = vmatpush1.msra.mxu0 0.0
    %240 = vmatprep.subr.mxu0 0.0
    %241 = vmatpush1.msra.mxu0 0.0
    %242 = vmatprep.subr.mxu0 0.0
    %243 = vmatpush1.msra.mxu0 0.0
    %244 = vmatprep.subr.mxu0 0.0
    %245 = vmatpush1.msra.mxu0 0.0
    %246 = vmatprep.subr.mxu0 0.0
    %247 = vmatpush1.msra.mxu0 0.0
    %248 = vmatprep.subr.mxu0 0.0
    %249 = vmatpush1.msra.mxu0 0.0
    %250 = vmatprep.subr.mxu0 0.0
    %251 = vmatpush1.msra.mxu0 0.0
    %252 = vmatprep.subr.mxu0 0.0
    %253 = vmatpush1.msra.mxu0 0.0
    %254 = vmatprep.subr.mxu0 0.0
    %255 = vmatpush1.msra.mxu0 0.0
    %256 = vmatprep.subr.mxu0 0.0
    %257 = vmatpush1.msra.mxu0 0.0
    %258 = vmatprep.subr.mxu0 0.0
    %259 = vmatpush1.msra.mxu0 0.0
    %260 = vmatprep.subr.mxu0 0.0
    %261 = vmatpush1.msra.mxu0 0.0
    %262 = vmatprep.subr.mxu0 0.0
    %263 = vmatpush1.msra.mxu0 0.0
    %264 = vmatprep.subr.mxu0 0.0
    %265 = vmatpush1.msra.mxu0 0.0
    %266 = vmatprep.subr.mxu0 0.0
    %267 = vmatpush1.msra.mxu0 0.0
    %268 = vmatprep.subr.mxu0 0.0
    %269 = vmatpush1.msra.mxu0 0.0
    %270 = vmatprep.subr.mxu0 0.0
    %271 = vmatpush1.msra.mxu0 0.0
    %272 = vmatprep.subr.mxu0 0.0
    %273 = vmatpush1.msra.mxu0 0.0
    %274 = vmatprep.subr.mxu0 0.0
    %275 = vmatpush1.msra.mxu0 0.0
    %276 = vmatprep.subr.mxu0 0.0
    %277 = vmatpush1.msra.mxu0 0.0
    %278 = vmatprep.subr.mxu0 0.0
    %279 = vmatpush1.msra.mxu0 0.0
    %280 = vmatprep.mubr.f32.mxu0 0.0
    %281 = vmatmul.mubr.f32.gmra.mrb[0].mxu0 %v211
    %v282 = vpop.f32.mrb[0].mxu0
    %v283 = vadd.f32 %v207, %v282
    %v284 = vpop.f32.mrb[0].mxu0
    %285 = vmatprep.mubr.f32.mxu0 0.0
    %286 = vmatmul.mubr.f32.gmra.mrb[0].mxu0 %v214
    %v287 = vpop.f32.mrb[0].mxu0
    %v288 = vadd.f32 %v207, %v287
    %v289 = vpop.f32.mrb[0].mxu0
    %290 = vdwg.mxu0
    %vm291 = vcmp.gt.f32.partialorder %v283, 0.0
    %vm292 = vcmp.gt.f32.partialorder %v288, 0.0
    %v293 = vmul.f32 %v283, 0.2
    %v294 = vmul.f32 %v288, 0.2
    %v295 = vsel %vm291, %v283, %v293
    %v296 = vsel %vm292, %v288, %v294
    %v298 = vlaneseq
    %v299 = vshrl.u32 %v298, 7
    %v300 = vsub.s32 0, %v299
    %v301 = vrot.slane %v196, %v300
    %v304 = vsel %vm209, %v295, 0
    %v307 = vsel %vm209, %v296, 0
    %309 = vmatprep.subr.mxu0 0.0
    %310 = vmatpush1.msra.mxu0 %v187
    %311 = vmatprep.subr.mxu0 0.0
    %312 = vmatpush1.msra.mxu0 %v188
    %313 = vmatprep.subr.mxu0 0.0
    %314 = vmatpush1.msra.mxu0 %v189
    %315 = vmatprep.subr.mxu0 0.0
    %316 = vmatpush1.msra.mxu0 %v190
    %317 = vmatprep.subr.mxu0 0.0
    %318 = vmatpush1.msra.mxu0 %v191
    %319 = vmatprep.subr.mxu0 0.0
    %320 = vmatpush1.msra.mxu0 %v192
    %321 = vmatprep.subr.mxu0 0.0
    %322 = vmatpush1.msra.mxu0 %v193
    %323 = vmatprep.subr.mxu0 0.0
    %324 = vmatpush1.msra.mxu0 %v194
    %325 = vmatprep.subr.mxu0 0.0
    %326 = vmatpush1.msra.mxu0 0.0
    %327 = vmatprep.subr.mxu0 0.0
    %328 = vmatpush1.msra.mxu0 0.0
    %329 = vmatprep.subr.mxu0 0.0
    %330 = vmatpush1.msra.mxu0 0.0
    %331 = vmatprep.subr.mxu0 0.0
    %332 = vmatpush1.msra.mxu0 0.0
    %333 = vmatprep.subr.mxu0 0.0
    %334 = vmatpush1.msra.mxu0 0.0
    %335 = vmatprep.subr.mxu0 0.0
    %336 = vmatpush1.msra.mxu0 0.0
    %337 = vmatprep.subr.mxu0 0.0
    %338 = vmatpush1.msra.mxu0 0.0
    %339 = vmatprep.subr.mxu0 0.0
    %340 = vmatpush1.msra.mxu0 0.0
    %341 = vmatprep.subr.mxu0 0.0
    %342 = vmatpush1.msra.mxu0 0.0
    %343 = vmatprep.subr.mxu0 0.0
    %344 = vmatpush1.msra.mxu0 0.0
    %345 = vmatprep.subr.mxu0 0.0
    %346 = vmatpush1.msra.mxu0 0.0
    %347 = vmatprep.subr.mxu0 0.0
    %348 = vmatpush1.msra.mxu0 0.0
    %349 = vmatprep.subr.mxu0 0.0
    %350 = vmatpush1.msra.mxu0 0.0
    %351 = vmatprep.subr.mxu0 0.0
    %352 = vmatpush1.msra.mxu0 0.0
    %353 = vmatprep.subr.mxu0 0.0
    %354 = vmatpush1.msra.mxu0 0.0
    %355 = vmatprep.subr.mxu0 0.0
    %356 = vmatpush1.msra.mxu0 0.0
    %357 = vmatprep.subr.mxu0 0.0
    %358 = vmatpush1.msra.mxu0 0.0
    %359 = vmatprep.subr.mxu0 0.0
    %360 = vmatpush1.msra.mxu0 0.0
    %361 = vmatprep.subr.mxu0 0.0
    %362 = vmatpush1.msra.mxu0 0.0
    %363 = vmatprep.subr.mxu0 0.0
    %364 = vmatpush1.msra.mxu0 0.0
    %365 = vmatprep.subr.mxu0 0.0
    %366 = vmatpush1.msra.mxu0 0.0
    %367 = vmatprep.subr.mxu0 0.0
    %368 = vmatpush1.msra.mxu0 0.0
    %369 = vmatprep.subr.mxu0 0.0
    %370 = vmatpush1.msra.mxu0 0.0
    %371 = vmatprep.subr.mxu0 0.0
    %372 = vmatpush1.msra.mxu0 0.0
    %373 = vmatprep.mubr.f32.mxu0 0.0
    %374 = vmatmul.mubr.f32.gmra.mrb[0].mxu0 %v304
    %v375 = vpop.f32.mrb[0].mxu0
    %v376 = vadd.f32 %v301, %v375
    %v377 = vpop.f32.mrb[0].mxu0
    %378 = vmatprep.mubr.f32.mxu0 0.0
    %379 = vmatmul.mubr.f32.gmra.mrb[0].mxu0 %v307
    %v380 = vpop.f32.mrb[0].mxu0
    %v381 = vadd.f32 %v301, %v380
    %v382 = vpop.f32.mrb[0].mxu0
    %383 = vdwg.mxu0
    %v384 = vadd.f32 %v169, %v376
    %v385 = vadd.f32 %v174, %v381
    %s386 = scalar_lea.vmem [#allocation7], 128
    %v387 = vld [vmem:[%s386] sm:$0xff]
    %v388 = vld [vmem:[%s386 + $0x8] sm:$0xff]
    %v389 = vld [vmem:[%s386 + $0x10] sm:$0xff]
    %v390 = vld [vmem:[%s386 + $0x18] sm:$0xff]
    %v391 = vld [vmem:[%s386 + $0x20] sm:$0xff]
    %v392 = vld [vmem:[%s386 + $0x28] sm:$0xff]
    %v393 = vld [vmem:[%s386 + $0x30] sm:$0xff]
    %v394 = vld [vmem:[%s386 + $0x38] sm:$0xff]
    %s395 = scalar_lea.vmem %s4, 2
    %v396 = vld [vmem:[%s395] sm:$0x1]
    %s397 = scalar_lea.vmem [#allocation7], 192
    %v398 = vld [vmem:[%s397] sm:$0xff]
    %v399 = vld [vmem:[%s397 + $0x8] sm:$0xff]
    %v400 = vld [vmem:[%s397 + $0x10] sm:$0xff]
    %v401 = vld [vmem:[%s397 + $0x18] sm:$0xff]
    %v402 = vld [vmem:[%s397 + $0x20] sm:$0xff]
    %v403 = vld [vmem:[%s397 + $0x28] sm:$0xff]
    %v404 = vld [vmem:[%s397 + $0x30] sm:$0xff]
    %v405 = vld [vmem:[%s397 + $0x38] sm:$0xff]
    %s406 = scalar_lea.vmem %s4, 3
    %v407 = vld [vmem:[%s406] sm:$0x1]
    %vm408 = vcmp.gt.f32.partialorder %v384, 0.0
    %vm409 = vcmp.gt.f32.partialorder %v385, 0.0
    %v410 = vmul.f32 %v384, 0.2
    %v411 = vmul.f32 %v385, 0.2
    %v412 = vsel %vm408, %v384, %v410
    %v413 = vsel %vm409, %v385, %v411
    %v415 = vlaneseq
    %v416 = vshrl.u32 %v415, 7
    %v417 = vsub.s32 0, %v416
    %v418 = vrot.slane %v396, %v417
    %v421 = vsel %vm209, %v412, 0
    %v424 = vsel %vm209, %v413, 0
    %426 = vmatprep.subr.mxu0 0.0
    %427 = vmatpush1.msra.mxu0 %v387
    %428 = vmatprep.subr.mxu0 0.0
    %429 = vmatpush1.msra.mxu0 %v388
    %430 = vmatprep.subr.mxu0 0.0
    %431 = vmatpush1.msra.mxu0 %v389
    %432 = vmatprep.subr.mxu0 0.0
    %433 = vmatpush1.msra.mxu0 %v390
    %434 = vmatprep.subr.mxu0 0.0
    %435 = vmatpush1.msra.mxu0 %v391
    %436 = vmatprep.subr.mxu0 0.0
    %437 = vmatpush1.msra.mxu0 %v392
    %438 = vmatprep.subr.mxu0 0.0
    %439 = vmatpush1.msra.mxu0 %v393
    %440 = vmatprep.subr.mxu0 0.0
    %441 = vmatpush1.msra.mxu0 %v394
    %442 = vmatprep.subr.mxu0 0.0
    %443 = vmatpush1.msra.mxu0 0.0
    %444 = vmatprep.subr.mxu0 0.0
    %445 = vmatpush1.msra.mxu0 0.0
    %446 = vmatprep.subr.mxu0 0.0
    %447 = vmatpush1.msra.mxu0 0.0
    %448 = vmatprep.subr.mxu0 0.0
    %449 = vmatpush1.msra.mxu0 0.0
    %450 = vmatprep.subr.mxu0 0.0
    %451 = vmatpush1.msra.mxu0 0.0
    %452 = vmatprep.subr.mxu0 0.0
    %453 = vmatpush1.msra.mxu0 0.0
    %454 = vmatprep.subr.mxu0 0.0
    %455 = vmatpush1.msra.mxu0 0.0
    %456 = vmatprep.subr.mxu0 0.0
    %457 = vmatpush1.msra.mxu0 0.0
    %458 = vmatprep.subr.mxu0 0.0
    %459 = vmatpush1.msra.mxu0 0.0
    %460 = vmatprep.subr.mxu0 0.0
    %461 = vmatpush1.msra.mxu0 0.0
    %462 = vmatprep.subr.mxu0 0.0
    %463 = vmatpush1.msra.mxu0 0.0
    %464 = vmatprep.subr.mxu0 0.0
    %465 = vmatpush1.msra.mxu0 0.0
    %466 = vmatprep.subr.mxu0 0.0
    %467 = vmatpush1.msra.mxu0 0.0
    %468 = vmatprep.subr.mxu0 0.0
    %469 = vmatpush1.msra.mxu0 0.0
    %470 = vmatprep.subr.mxu0 0.0
    %471 = vmatpush1.msra.mxu0 0.0
    %472 = vmatprep.subr.mxu0 0.0
    %473 = vmatpush1.msra.mxu0 0.0
    %474 = vmatprep.subr.mxu0 0.0
    %475 = vmatpush1.msra.mxu0 0.0
    %476 = vmatprep.subr.mxu0 0.0
    %477 = vmatpush1.msra.mxu0 0.0
    %478 = vmatprep.subr.mxu0 0.0
    %479 = vmatpush1.msra.mxu0 0.0
    %480 = vmatprep.subr.mxu0 0.0
    %481 = vmatpush1.msra.mxu0 0.0
    %482 = vmatprep.subr.mxu0 0.0
    %483 = vmatpush1.msra.mxu0 0.0
    %484 = vmatprep.subr.mxu0 0.0
    %485 = vmatpush1.msra.mxu0 0.0
    %486 = vmatprep.subr.mxu0 0.0
    %487 = vmatpush1.msra.mxu0 0.0
    %488 = vmatprep.subr.mxu0 0.0
    %489 = vmatpush1.msra.mxu0 0.0
    %490 = vmatprep.mubr.f32.mxu0 0.0
    %491 = vmatmul.mubr.f32.gmra.mrb[0].mxu0 %v421
    %v492 = vpop.f32.mrb[0].mxu0
    %v493 = vadd.f32 %v418, %v492
    %v494 = vpop.f32.mrb[0].mxu0
    %495 = vmatprep.mubr.f32.mxu0 0.0
    %496 = vmatmul.mubr.f32.gmra.mrb[0].mxu0 %v424
    %v497 = vpop.f32.mrb[0].mxu0
    %v498 = vadd.f32 %v418, %v497
    %v499 = vpop.f32.mrb[0].mxu0
    %500 = vdwg.mxu0
    %vm501 = vcmp.gt.f32.partialorder %v493, 0.0
    %vm502 = vcmp.gt.f32.partialorder %v498, 0.0
    %v503 = vmul.f32 %v493, 0.2
    %v504 = vmul.f32 %v498, 0.2
    %v505 = vsel %vm501, %v493, %v503
    %v506 = vsel %vm502, %v498, %v504
    %v508 = vlaneseq
    %v509 = vshrl.u32 %v508, 7
    %v510 = vsub.s32 0, %v509
    %v511 = vrot.slane %v407, %v510
    %v514 = vsel %vm209, %v505, 0
    %v517 = vsel %vm209, %v506, 0
    %519 = vmatprep.subr.mxu0 0.0
    %520 = vmatpush1.msra.mxu0 %v398
    %521 = vmatprep.subr.mxu0 0.0
    %522 = vmatpush1.msra.mxu0 %v399
    %523 = vmatprep.subr.mxu0 0.0
    %524 = vmatpush1.msra.mxu0 %v400
    %525 = vmatprep.subr.mxu0 0.0
    %526 = vmatpush1.msra.mxu0 %v401
    %527 = vmatprep.subr.mxu0 0.0
    %528 = vmatpush1.msra.mxu0 %v402
    %529 = vmatprep.subr.mxu0 0.0
    %530 = vmatpush1.msra.mxu0 %v403
    %531 = vmatprep.subr.mxu0 0.0
    %532 = vmatpush1.msra.mxu0 %v404
    %533 = vmatprep.subr.mxu0 0.0
    %534 = vmatpush1.msra.mxu0 %v405
    %535 = vmatprep.subr.mxu0 0.0
    %536 = vmatpush1.msra.mxu0 0.0
    %537 = vmatprep.subr.mxu0 0.0
    %538 = vmatpush1.msra.mxu0 0.0
    %539 = vmatprep.subr.mxu0 0.0
    %540 = vmatpush1.msra.mxu0 0.0
    %541 = vmatprep.subr.mxu0 0.0
    %542 = vmatpush1.msra.mxu0 0.0
    %543 = vmatprep.subr.mxu0 0.0
    %544 = vmatpush1.msra.mxu0 0.0
    %545 = vmatprep.subr.mxu0 0.0
    %546 = vmatpush1.msra.mxu0 0.0
    %547 = vmatprep.subr.mxu0 0.0
    %548 = vmatpush1.msra.mxu0 0.0
    %549 = vmatprep.subr.mxu0 0.0
    %550 = vmatpush1.msra.mxu0 0.0
    %551 = vmatprep.subr.mxu0 0.0
    %552 = vmatpush1.msra.mxu0 0.0
    %553 = vmatprep.subr.mxu0 0.0
    %554 = vmatpush1.msra.mxu0 0.0
    %555 = vmatprep.subr.mxu0 0.0
    %556 = vmatpush1.msra.mxu0 0.0
    %557 = vmatprep.subr.mxu0 0.0
    %558 = vmatpush1.msra.mxu0 0.0
    %559 = vmatprep.subr.mxu0 0.0
    %560 = vmatpush1.msra.mxu0 0.0
    %561 = vmatprep.subr.mxu0 0.0
    %562 = vmatpush1.msra.mxu0 0.0
    %563 = vmatprep.subr.mxu0 0.0
    %564 = vmatpush1.msra.mxu0 0.0
    %565 = vmatprep.subr.mxu0 0.0
    %566 = vmatpush1.msra.mxu0 0.0
    %567 = vmatprep.subr.mxu0 0.0
    %568 = vmatpush1.msra.mxu0 0.0
    %569 = vmatprep.subr.mxu0 0.0
    %570 = vmatpush1.msra.mxu0 0.0
    %571 = vmatprep.subr.mxu0 0.0
    %572 = vmatpush1.msra.mxu0 0.0
    %573 = vmatprep.subr.mxu0 0.0
    %574 = vmatpush1.msra.mxu0 0.0
    %575 = vmatprep.subr.mxu0 0.0
    %576 = vmatpush1.msra.mxu0 0.0
    %577 = vmatprep.subr.mxu0 0.0
    %578 = vmatpush1.msra.mxu0 0.0
    %579 = vmatprep.subr.mxu0 0.0
    %580 = vmatpush1.msra.mxu0 0.0
    %581 = vmatprep.subr.mxu0 0.0
    %582 = vmatpush1.msra.mxu0 0.0
    %583 = vmatprep.mubr.f32.mxu0 0.0
    %584 = vmatmul.mubr.f32.gmra.mrb[0].mxu0 %v514
    %v585 = vpop.f32.mrb[0].mxu0
    %v586 = vadd.f32 %v511, %v585
    %v587 = vpop.f32.mrb[0].mxu0
    %588 = vmatprep.mubr.f32.mxu0 0.0
    %589 = vmatmul.mubr.f32.gmra.mrb[0].mxu0 %v517
    %v590 = vpop.f32.mrb[0].mxu0
    %v591 = vadd.f32 %v511, %v590
    %v592 = vpop.f32.mrb[0].mxu0
    %593 = vdwg.mxu0
    %v594 = vadd.f32 %v384, %v586
    %v595 = vadd.f32 %v385, %v591
    %vm596 = vcmp.gt.f32.partialorder %v594, 0.0
    %vm597 = vcmp.gt.f32.partialorder %v595, 0.0
    %v598 = vmul.f32 %v594, 0.2
    %v599 = vmul.f32 %v595, 0.2
    %v600 = vsel %vm596, %v594, %v598
    %v601 = vsel %vm597, %v595, %v599
    %v602 = vld [vmem:[#allocation8] sm:$0xff]
    %v603 = vld [vmem:[#allocation8 + $0x8] sm:$0xff]
    %v604 = vld [vmem:[#allocation8 + $0x10] sm:$0xff]
    %v605 = vld [vmem:[#allocation8 + $0x18] sm:$0xff]
    %v606 = vld [vmem:[#allocation8 + $0x20] sm:$0xff]
    %v607 = vld [vmem:[#allocation8 + $0x28] sm:$0xff]
    %v608 = vld [vmem:[#allocation8 + $0x30] sm:$0xff]
    %v609 = vld [vmem:[#allocation8 + $0x38] sm:$0xff]
    %v610 = vld [vmem:[%s6] sm:$0x1]
    %v612 = vlaneseq
    %v613 = vshrl.u32 %v612, 7
    %v614 = vsub.s32 0, %v613
    %v615 = vrot.slane %v610, %v614
    %v618 = vsel %vm209, %v600, 0
    %v621 = vsel %vm209, %v601, 0
    %623 = vmatprep.subr.mxu0 0.0
    %624 = vmatpush1.msra.mxu0 %v602
    %625 = vmatprep.subr.mxu0 0.0
    %626 = vmatpush1.msra.mxu0 %v603
    %627 = vmatprep.subr.mxu0 0.0
    %628 = vmatpush1.msra.mxu0 %v604
    %629 = vmatprep.subr.mxu0 0.0
    %630 = vmatpush1.msra.mxu0 %v605
    %631 = vmatprep.subr.mxu0 0.0
    %632 = vmatpush1.msra.mxu0 %v606
    %633 = vmatprep.subr.mxu0 0.0
    %634 = vmatpush1.msra.mxu0 %v607
    %635 = vmatprep.subr.mxu0 0.0
    %636 = vmatpush1.msra.mxu0 %v608
    %637 = vmatprep.subr.mxu0 0.0
    %638 = vmatpush1.msra.mxu0 %v609
    %639 = vmatprep.subr.mxu0 0.0
    %640 = vmatpush1.msra.mxu0 0.0
    %641 = vmatprep.subr.mxu0 0.0
    %642 = vmatpush1.msra.mxu0 0.0
    %643 = vmatprep.subr.mxu0 0.0
    %644 = vmatpush1.msra.mxu0 0.0
    %645 = vmatprep.subr.mxu0 0.0
    %646 = vmatpush1.msra.mxu0 0.0
    %647 = vmatprep.subr.mxu0 0.0
    %648 = vmatpush1.msra.mxu0 0.0
    %649 = vmatprep.subr.mxu0 0.0
    %650 = vmatpush1.msra.mxu0 0.0
    %651 = vmatprep.subr.mxu0 0.0
    %652 = vmatpush1.msra.mxu0 0.0
    %653 = vmatprep.subr.mxu0 0.0
    %654 = vmatpush1.msra.mxu0 0.0
    %655 = vmatprep.subr.mxu0 0.0
    %656 = vmatpush1.msra.mxu0 0.0
    %657 = vmatprep.subr.mxu0 0.0
    %658 = vmatpush1.msra.mxu0 0.0
    %659 = vmatprep.subr.mxu0 0.0
    %660 = vmatpush1.msra.mxu0 0.0
    %661 = vmatprep.subr.mxu0 0.0
    %662 = vmatpush1.msra.mxu0 0.0
    %663 = vmatprep.subr.mxu0 0.0
    %664 = vmatpush1.msra.mxu0 0.0
    %665 = vmatprep.subr.mxu0 0.0
    %666 = vmatpush1.msra.mxu0 0.0
    %667 = vmatprep.subr.mxu0 0.0
    %668 = vmatpush1.msra.mxu0 0.0
    %669 = vmatprep.subr.mxu0 0.0
    %670 = vmatpush1.msra.mxu0 0.0
    %671 = vmatprep.subr.mxu0 0.0
    %672 = vmatpush1.msra.mxu0 0.0
    %673 = vmatprep.subr.mxu0 0.0
    %674 = vmatpush1.msra.mxu0 0.0
    %675 = vmatprep.subr.mxu0 0.0
    %676 = vmatpush1.msra.mxu0 0.0
    %677 = vmatprep.subr.mxu0 0.0
    %678 = vmatpush1.msra.mxu0 0.0
    %679 = vmatprep.subr.mxu0 0.0
    %680 = vmatpush1.msra.mxu0 0.0
    %681 = vmatprep.subr.mxu0 0.0
    %682 = vmatpush1.msra.mxu0 0.0
    %683 = vmatprep.subr.mxu0 0.0
    %684 = vmatpush1.msra.mxu0 0.0
    %685 = vmatprep.subr.mxu0 0.0
    %686 = vmatpush1.msra.mxu0 0.0
    %687 = vmatprep.mubr.f32.mxu0 0.0
    %688 = vmatmul.mubr.f32.gmra.mrb[0].mxu0 %v618
    %v689 = vpop.f32.mrb[0].mxu0
    %v690 = vadd.f32 %v615, %v689
    %v691 = vpop.f32.mrb[0].mxu0
    %692 = vmatprep.mubr.f32.mxu0 0.0
    %693 = vmatmul.mubr.f32.gmra.mrb[0].mxu0 %v621
    %v694 = vpop.f32.mrb[0].mxu0
    %v695 = vadd.f32 %v615, %v694
    %v696 = vpop.f32.mrb[0].mxu0
    %697 = vdwg.mxu0
    %698 = vst [vmem:[#allocation10] sm:$0xff] %v690
    %699 = vst [vmem:[#allocation10 + $0x8] sm:$0xff] %v695
    // Predicated region
    $region46: #{tpu_custom_call.1} parent=1 // pred_check
      _
    $region47: #{tpu_custom_call.1} parent=1 // pred_check_branch
      %701 = sbr.rel (0) target = $region49
    $region48: #{tpu_custom_call.1} parent=1 // pred_region
      %s703 = ssub.s32 256, 256
      %704 = vsyncadd [#allocation4], %s703
      %s705 = sshll.u32 [#allocation10], 4
      %s706 = int_to_ptr.vmem [resolvable:$true] %s705
      %711 = dma.vmem_to_hbm [thread:$0]  %s706, 256, %s7, [#allocation4], 128, 128, 8
    $region49: #{tpu_custom_call.1} parent=1 // pred_fallthru
      _
    // Predicated region
    $region50: #{tpu_custom_call.1} parent=1 // pred_check
      _
    $region51: #{tpu_custom_call.1} parent=1 // pred_check_branch
      %713 = sbr.rel (0) target = $region53
    $region52: #{tpu_custom_call.1} parent=1 // pred_region
      %714 = dma.done [#allocation4], 256
    $region53: #{tpu_custom_call.1} parent=1 // pred_fallthru
      _
    %715 = vsyncpa [#allocation3], 1
    %716 = vsyncpa [#allocation6], 1
    %717 = vsyncpa [#allocation9], 1
    %718 = vsyncpa [#allocation4], 1

</llo_original>
